<compile_context>
chip_gen: v7x
topology: tpu7x:2x2x1
jax: 0.10.0
libtpu: 0.0.40
codegen_flags: <defaults>
</compile_context>

<pallas_src>
import functools

import jax
import jax.numpy as jnp
from jax.experimental import pallas as pl
from jax.experimental.pallas import tpu as pltpu

F32 = jnp.float32
BF16 = jnp.bfloat16
NEG_BIG = -1e30          # "minus infinity" for padded logits
MIB = 1024 * 1024


def _round_up(x, m):
    return ((x + m - 1) // m) * m


# ---------------------------------------------------------------------------
# Prep kernel 1: per-topic logsumexp of topic-word logits over V (streaming).
# ---------------------------------------------------------------------------
def _beta_stats_kernel(te_ref, weT_ref, c_ref, m_acc, l_acc, *,
                       v_real, v_tile, need_mask):
    v = pl.program_id(0)

    @pl.when(v == 0)
    def _init():
        m_acc[...] = jnp.full(m_acc.shape, -jnp.inf, F32)
        l_acc[...] = jnp.zeros(l_acc.shape, F32)

    # [K_sub, Vt] logits for this vocab tile (bf16 operands, f32 accumulate).
    logits = jnp.dot(te_ref[...], weT_ref[...], preferred_element_type=F32)
    if need_mask:                       # padded vocab columns -> -inf
        col = (jax.lax.broadcasted_iota(jnp.int32, logits.shape, 1)
               + v * v_tile)
        logits = jnp.where(col < v_real, logits, NEG_BIG)

    # Online (streaming) logsumexp over V.
    m_new = jnp.maximum(m_acc[...], jnp.max(logits, axis=1, keepdims=True))
    l_acc[...] = (l_acc[...] * jnp.exp(m_acc[...] - m_new)
                  + jnp.sum(jnp.exp(logits - m_new), axis=1, keepdims=True))
    m_acc[...] = m_new

    @pl.when(v == pl.num_programs(0) - 1)
    def _finalize():
        c_ref[...] = m_acc[...] + jnp.log(l_acc[...])     # per-topic logsumexp


# ---------------------------------------------------------------------------
# Prep kernel 2: materialize beta = exp(logits - c) (f32 exp, bf16 store).
# ---------------------------------------------------------------------------
def _beta_materialize_kernel(c_ref, te_ref, weT_ref, beta_ref, *,
                             v_real, v_tile, need_mask):
    logits = jnp.dot(te_ref[...], weT_ref[...], preferred_element_type=F32)
    if need_mask:
        v = pl.program_id(0)
        col = (jax.lax.broadcasted_iota(jnp.int32, logits.shape, 1)
               + v * v_tile)
        logits = jnp.where(col < v_real, logits, NEG_BIG)
    beta_ref[...] = jnp.exp(logits - c_ref[...]).astype(beta_ref.dtype)


# ---------------------------------------------------------------------------
# Kernel E: encoder.  Streams x[:, v] (bf16) and w1[v, :] (bf16) over V tiles,
#           accumulating x @ w1 and sum(x) in f32 VMEM scratch; finalizes the
#           MLP + heads + theta softmax on the last V tile of each batch block.
# ---------------------------------------------------------------------------
def _encoder_kernel(x_ref, w1_ref, w2_ref, b1_ref, b2_ref,
                    w21_ref, b21_ref, w22_ref, b22_ref,
                    mu_ref, logvar_ref, theta_ref,
                    acc_xw1, acc_xsum):
    v = pl.program_id(1)

    @pl.when(v == 0)
    def _init():
        acc_xw1[...] = jnp.zeros(acc_xw1.shape, F32)
        acc_xsum[...] = jnp.zeros(acc_xsum.shape, F32)

    x_tile = x_ref[...]                                        # [bt, Vt] bf16
    acc_xsum[...] += jnp.sum(x_tile.astype(F32), axis=1, keepdims=True)
    # norm_x @ w1 == (x @ w1) * (1 / (sum(x)+eps)) row-wise -> normalize once
    # at the end; bf16 MXU operands, f32 accumulation.
    acc_xw1[...] += jnp.dot(x_tile, w1_ref[...], preferred_element_type=F32)

    @pl.when(v == pl.num_programs(1) - 1)
    def _finalize():
        inv_norm = pl.reciprocal(acc_xsum[...] + 1e-6, approx=False)   # exact
        h1 = jnp.maximum(acc_xw1[...] * inv_norm + b1_ref[...], 0.0)
        h2 = jnp.dot(h1.astype(BF16), w2_ref[...],
                     preferred_element_type=F32) + b2_ref[...]
        h2 = jnp.maximum(h2, 0.0)                              # Dropout = id (eval)
        h2b = h2.astype(BF16)
        mu = jnp.dot(h2b, w21_ref[...], preferred_element_type=F32) + b21_ref[...]
        logvar = jnp.dot(h2b, w22_ref[...], preferred_element_type=F32) + b22_ref[...]
        mu_ref[...] = mu
        logvar_ref[...] = logvar
        # theta = softmax(mu); padded topic columns have bias -1e30 -> exact 0.
        t_max = jnp.max(mu, axis=-1, keepdims=True)
        e = jnp.exp(mu - t_max)
        theta_ref[...] = e * pl.reciprocal(
            jnp.sum(e, axis=-1, keepdims=True), approx=True)   # EUP slot


# ---------------------------------------------------------------------------
# Kernel R: recon.  Pure theta @ beta_tile stream, lane-dense [bt, Vt] output.
# ---------------------------------------------------------------------------
def _recon_kernel(theta_ref, beta_ref, recon_ref):
    recon_ref[...] = jnp.dot(theta_ref[...], beta_ref[...],
                             preferred_element_type=F32).astype(recon_ref.dtype)


# ---------------------------------------------------------------------------
# Tiling / VMEM budgeting (generation-aware: cap limit at 40 MiB for v7x)
# ---------------------------------------------------------------------------
def _encoder_vmem_bytes(bt, v_tile, H, Kp):
    streamed = 2 * (bt * v_tile * 2 + v_tile * H * 2)     # x, w1 double-buffered
    resident = H * H * 2 + 2 * H * Kp * 2 + (4 * H + 4 * Kp) * 4
    outputs = 3 * bt * Kp * 4 * 2
    scratch = bt * H * 4 + bt * 4
    return streamed + resident + outputs + scratch


def _recon_vmem_bytes(bt, v_tile, K_sub):
    return 2 * (K_sub * v_tile * 2 + bt * v_tile * 4) + 2 * bt * K_sub * 2


def _prep_vmem_bytes(v_tile, E, K_sub):
    return 2 * (E * v_tile * 2 + K_sub * v_tile * 2) + K_sub * E * 2 + 8 * K_sub * 4


def _choose_tiling(V, H, E, K_sub, Kp, bt_nominal=128,
                   tile_budget=24 * MIB, vmem_cap=40 * MIB):
    v_cap = _round_up(V, 128)
    v_tile = 128
    for cand in (2048, 1024, 512, 256, 128):
        if cand > v_cap:
            continue
        need = max(_encoder_vmem_bytes(bt_nominal, cand, H, Kp),
                   _recon_vmem_bytes(bt_nominal, cand, K_sub),
                   _prep_vmem_bytes(cand, E, K_sub))
        if need <= tile_budget:
            v_tile = cand
            break
    need = max(_encoder_vmem_bytes(bt_nominal, v_tile, H, Kp),
               _recon_vmem_bytes(bt_nominal, v_tile, K_sub),
               _prep_vmem_bytes(v_tile, E, K_sub))
    vmem_limit = int(min(vmem_cap, max(3 * need, 24 * MIB)))
    return v_tile, vmem_limit


def _pick_batch_block(B):
    b16 = _round_up(max(B, 1), 16)          # bf16 sublane pack = 16
    if b16 <= 128:
        return b16, b16
    bt = 128
    return _round_up(B, bt), bt


# ---------------------------------------------------------------------------
# Wrappers
# ---------------------------------------------------------------------------
def prepare_params(params):
    """One-time (per weight update) preparation: layout plumbing + cached
    topic-word distribution beta (bf16, [K_sub, V_pad])."""
    V, E = params['word_emb'].shape
    K = params['topic_emb'].shape[0]
    H = params['w1'].shape[1]

    K_sub = _round_up(K, 16)               # sublane pad for beta / topic_emb
    Kp = _round_up(K, 128)                 # lane pad for mu / logvar / theta

    v_tile, vmem_limit = _choose_tiling(V, H, E, K_sub, Kp)
    V_pad = _round_up(V, v_tile)
    nv = V_pad // v_tile
    need_mask = V_pad != V

    # Topic-dim padding: zero weight columns, -1e30 bias -> theta == 0 there.
    w21p = jnp.zeros((H, Kp), F32).at[:, :K].set(params['w21'])
    w22p = jnp.zeros((H, Kp), F32).at[:, :K].set(params['w22'])
    b21p = jnp.full((1, Kp), NEG_BIG, F32).at[:, :K].set(params['b21'].reshape(1, -1))
    b22p = jnp.zeros((1, Kp), F32).at[:, :K].set(params['b22'].reshape(1, -1))
    tep = jnp.zeros((K_sub, E), F32).at[:K].set(params['topic_emb'])

    # Vocab-dim padding: zero rows / columns (masked -inf in the beta passes).
    w1p = jnp.zeros((V_pad, H), F32).at[:V].set(params['w1'])
    weTp = jnp.zeros((E, V_pad), F32).at[:, :V].set(params['word_emb'].T)

    prep = {
        'K': K, 'K_sub': K_sub, 'Kp': Kp, 'H': H, 'E': E,
        'V': V, 'V_pad': V_pad, 'v_tile': v_tile, 'nv': nv,
        'vmem_limit': vmem_limit,
        # bf16 weights (halve DMA bytes, feed the MXU directly)
        'w1_b': w1p.astype(BF16),
        'w2_b': params['w2'].astype(BF16),
        'w21_b': w21p.astype(BF16),
        'w22_b': w22p.astype(BF16),
        'te_b': tep.astype(BF16),
        'weT_b': weTp.astype(BF16),
        # f32 biases (VPU adds)
        'b1': params['b1'].reshape(1, -1).astype(F32),
        'b2': params['b2'].reshape(1, -1).astype(F32),
        'b21p': b21p, 'b22p': b22p,
    }

    # --- pass 1: per-topic logsumexp over V (streaming, "arbitrary" axis) ---
    c = pl.pallas_call(
        functools.partial(_beta_stats_kernel, v_real=V, v_tile=v_tile,
                          need_mask=need_mask),
        out_shape=jax.ShapeDtypeStruct((K_sub, 1), F32),
        grid_spec=pltpu.PrefetchScalarGridSpec(
            num_scalar_prefetch=0, grid=(nv,),
            in_specs=[pl.BlockSpec((K_sub, E), lambda v: (0, 0)),
                      pl.BlockSpec((E, v_tile), lambda v: (0, v))],
            out_specs=pl.BlockSpec((K_sub, 1), lambda v: (0, 0)),
            scratch_shapes=[pltpu.VMEM((K_sub, 1), F32),
                            pltpu.VMEM((K_sub, 1), F32)]),
        compiler_params=pltpu.CompilerParams(
            dimension_semantics=("arbitrary",),
            vmem_limit_bytes=vmem_limit),
    )(prep['te_b'], prep['weT_b'])

    # --- pass 2: materialize beta (f32 exp -> bf16 store), cached -----------
    prep['beta_b'] = pl.pallas_call(
        functools.partial(_beta_materialize_kernel, v_real=V, v_tile=v_tile,
                          need_mask=need_mask),
        out_shape=jax.ShapeDtypeStruct((K_sub, V_pad), BF16),
        grid_spec=pltpu.PrefetchScalarGridSpec(
            num_scalar_prefetch=0, grid=(nv,),
            in_specs=[pl.BlockSpec((K_sub, 1), lambda v: (0, 0)),
                      pl.BlockSpec((K_sub, E), lambda v: (0, 0)),
                      pl.BlockSpec((E, v_tile), lambda v: (0, v))],
            out_specs=pl.BlockSpec((K_sub, v_tile), lambda v: (0, v))),
        compiler_params=pltpu.CompilerParams(
            dimension_semantics=("parallel",),
            vmem_limit_bytes=vmem_limit),
    )(c, prep['te_b'], prep['weT_b'])
    return prep


def etm_forward(x, prep, recon_dtype=F32):
    """Per-batch forward.  Returns (recon_x [B,V], mu [B,K], logvar [B,K])."""
    B, V = x.shape
    assert V == prep['V']
    H, Kp, K, K_sub = prep['H'], prep['Kp'], prep['K'], prep['K_sub']
    V_pad, v_tile, nv = prep['V_pad'], prep['v_tile'], prep['nv']
    vmem_limit = prep['vmem_limit']

    B_pad, bt = _pick_batch_block(B)
    nb = B_pad // bt

    # Stream x in bf16 (counts <= 256 exact); pad batch/vocab with zeros.
    xb = jnp.zeros((B_pad, V_pad), BF16).at[:B, :V].set(x.astype(BF16))

    # --- pass 1: encoder (parallel batch blocks x V reduction) --------------
    mu_p, logvar_p, theta_p = pl.pallas_call(
        _encoder_kernel,
        out_shape=(jax.ShapeDtypeStruct((B_pad, Kp), F32),
                   jax.ShapeDtypeStruct((B_pad, Kp), F32),
                   jax.ShapeDtypeStruct((B_pad, Kp), F32)),
        grid_spec=pltpu.PrefetchScalarGridSpec(
            num_scalar_prefetch=0,
            grid=(nb, nv),
            in_specs=[
                pl.BlockSpec((bt, v_tile), lambda b, v: (b, v)),   # x tile (bf16)
                pl.BlockSpec((v_tile, H), lambda b, v: (v, 0)),    # w1 tile
                pl.BlockSpec((H, H), lambda b, v: (0, 0)),         # w2 (resident)
                pl.BlockSpec((1, H), lambda b, v: (0, 0)),         # b1
                pl.BlockSpec((1, H), lambda b, v: (0, 0)),         # b2
                pl.BlockSpec((H, Kp), lambda b, v: (0, 0)),        # w21
                pl.BlockSpec((1, Kp), lambda b, v: (0, 0)),        # b21
                pl.BlockSpec((H, Kp), lambda b, v: (0, 0)),        # w22
                pl.BlockSpec((1, Kp), lambda b, v: (0, 0)),        # b22
            ],
            out_specs=(pl.BlockSpec((bt, Kp), lambda b, v: (b, 0)),
                       pl.BlockSpec((bt, Kp), lambda b, v: (b, 0)),
                       pl.BlockSpec((bt, Kp), lambda b, v: (b, 0))),
            scratch_shapes=[pltpu.VMEM((bt, H), F32),              # acc x @ w1
                            pltpu.VMEM((bt, 1), F32)]),            # acc sum(x)
        compiler_params=pltpu.CompilerParams(
            dimension_semantics=("parallel", "arbitrary"),
            vmem_limit_bytes=vmem_limit),
    )(xb, prep['w1_b'], prep['w2_b'], prep['b1'], prep['b2'],
      prep['w21_b'], prep['b21p'], prep['w22_b'], prep['b22p'])

    # Padded topic columns of theta are exactly 0, so the K_sub slice is safe.
    theta_sub = theta_p[:, :K_sub].astype(BF16)

    # --- pass 2: recon = theta @ cached beta (fully parallel grid) ----------
    recon_p = pl.pallas_call(
        _recon_kernel,
        out_shape=jax.ShapeDtypeStruct((B_pad, V_pad), recon_dtype),
        grid_spec=pltpu.PrefetchScalarGridSpec(
            num_scalar_prefetch=0,
            grid=(nb, nv),
            in_specs=[
                pl.BlockSpec((bt, K_sub), lambda b, v: (b, 0)),     # theta
                pl.BlockSpec((K_sub, v_tile), lambda b, v: (0, v)), # beta tile
            ],
            out_specs=pl.BlockSpec((bt, v_tile), lambda b, v: (b, v))),
        compiler_params=pltpu.CompilerParams(
            dimension_semantics=("parallel", "parallel"),
            vmem_limit_bytes=vmem_limit),
    )(theta_sub, prep['beta_b'])

    return recon_p[:B, :V], mu_p[:B, :K], logvar_p[:B, :K]


# ---------------------------------------------------------------------------
# References and init
# ---------------------------------------------------------------------------
def init_params(key, vocab_size, embed_size, n_topics, encoder_dim):
    ks = jax.random.split(key, 10)

    def lin(k, fan_in, fan_out):
        return jax.random.normal(k, (fan_in, fan_out), F32) * 0.05

    return {
        'word_emb': jax.random.normal(ks[0], (vocab_size, embed_size), F32),
        'topic_emb': jax.random.normal(ks[1], (n_topics, embed_size), F32),
        'w1': lin(ks[2], vocab_size, encoder_dim),
        'b1': jax.random.normal(ks[3], (1, encoder_dim), F32) * 0.01,
        'w2': lin(ks[4], encoder_dim, encoder_dim),
        'b2': jax.random.normal(ks[5], (1, encoder_dim), F32) * 0.01,
        'w21': lin(ks[6], encoder_dim, n_topics),
        'b21': jax.random.normal(ks[7], (1, n_topics), F32) * 0.01,
        'w22': lin(ks[8], encoder_dim, n_topics),
        'b22': jax.random.normal(ks[9], (1, n_topics), F32) * 0.01,
    }


def reference_forward(x, p):
    """Pure-JAX f32 reference (eval-mode ETM forward) — semantic ground truth."""
    norm_x = x / (jnp.sum(x, axis=1, keepdims=True) + 1e-6)
    h1 = jax.nn.relu(norm_x @ p['w1'] + p['b1'])
    h2 = jax.nn.relu(h1 @ p['w2'] + p['b2'])
    mu = h2 @ p['w21'] + p['b21']
    logvar = h2 @ p['w22'] + p['b22']
    theta = jax.nn.softmax(mu, axis=-1)
    beta = jax.nn.softmax(p['topic_emb'] @ p['word_emb'].T, axis=1)
    recon = theta @ beta
    return recon, mu, logvar


def matched_reference(x, p):
    """Pure-JAX reference using the same bf16-operand / f32-accumulate matmuls
    and bf16 beta cache as the kernels (tight numerical check)."""
    dot = functools.partial(jnp.dot, preferred_element_type=F32)
    xb = x.astype(BF16)
    xsum = jnp.sum(xb.astype(F32), axis=1, keepdims=True)
    xw1 = dot(xb, p['w1'].astype(BF16))
    h1 = jax.nn.relu(xw1 / (xsum + 1e-6) + p['b1'])
    h2 = jax.nn.relu(dot(h1.astype(BF16), p['w2'].astype(BF16)) + p['b2'])
    mu = dot(h2.astype(BF16), p['w21'].astype(BF16)) + p['b21']
    logvar = dot(h2.astype(BF16), p['w22'].astype(BF16)) + p['b22']
    theta = jax.nn.softmax(mu, axis=-1)
    logits = dot(p['topic_emb'].astype(BF16), p['word_emb'].astype(BF16).T)
    beta = jax.nn.softmax(logits, axis=1).astype(BF16)
    recon = dot(theta.astype(BF16), beta)
    return recon, mu, logvar


if __name__ == "__main__":
    # Small shapes consistent with the module's forward (bow x: [batch, vocab]).
    B, V = 8, 1024
    embed_size, n_topics, encoder_dim = 32, 16, 64

    key = jax.random.PRNGKey(0)
    k_x, k_p = jax.random.split(key)

    x = jax.random.poisson(k_x, lam=1.0, shape=(B, V)).astype(F32)
    params = init_params(k_p, V, embed_size, n_topics, encoder_dim)

    prep = prepare_params(params)                       # cached once per weight update
    recon, mu, logvar = jax.block_until_ready(etm_forward(x, prep))

    assert recon.shape == (B, V)
    assert mu.shape == (B, n_topics) and logvar.shape == (B, n_topics)
    assert bool(jnp.all(jnp.isfinite(recon)))

    # Tight check against a numerics-matched (bf16-MXU, bf16-beta) reference.
    r_m, mu_m, lv_m = matched_reference(x, params)
    assert jnp.allclose(mu, mu_m, rtol=1e-2, atol=5e-4), "mu mismatch (matched)"
    assert jnp.allclose(logvar, lv_m, rtol=1e-2, atol=5e-4), "logvar mismatch (matched)"
    assert jnp.allclose(recon, r_m, rtol=2e-2, atol=2e-4), "recon mismatch (matched)"

    # Looser semantic check against the pure-f32 eval-mode reference
    # (slack accounts for bf16 MXU operands and the bf16 beta cache).
    r_f, mu_f, lv_f = reference_forward(x, params)
    assert jnp.allclose(mu, mu_f, rtol=1e-1, atol=5e-3), "mu mismatch (f32)"
    assert jnp.allclose(logvar, lv_f, rtol=1e-1, atol=5e-3), "logvar mismatch (f32)"
    assert jnp.allclose(recon, r_f, rtol=2.5e-1, atol=5e-3), "recon mismatch (f32)"

    print("KERNEL_OK")
</pallas_src>

<mosaic_0001>
module attributes {stable_mosaic.version = 11 : i64} {
  func.func @_beta_stats_kernel(%arg0: i32, %arg1: memref<16x32xbf16, #tpu.memory_space<vmem>>, %arg2: memref<32x1024xbf16, #tpu.memory_space<vmem>>, %arg3: memref<16x1xf32, #tpu.memory_space<vmem>>, %arg4: memref<16x1xf32, #tpu.memory_space<vmem>>, %arg5: memref<16x1xf32, #tpu.memory_space<vmem>>) attributes {dimension_semantics = [#tpu.dimension_semantics<arbitrary>], iteration_bounds = array<i64: 1>, scalar_prefetch = 0 : i64, scratch_operands = 2 : i64, tpu.core_type = #tpu.core_type<tc>, window_params = [{pipeline_mode = #tpu.pipeline_mode<synchronous>, transform_indices = @transform_0, window_bounds = array<i64: 16, 32>}, {transform_indices = @transform_1, window_bounds = array<i64: 32, 1024>}, {pipeline_mode = #tpu.pipeline_mode<synchronous>, transform_indices = @transform_2, window_bounds = array<i64: 16, 1>}]} {
    %c0_i32 = arith.constant 0 : i32
    %0 = arith.cmpi eq, %arg0, %c0_i32 : i32
    %1 = arith.extui %0 : i1 to i32
    %c0_i32_0 = arith.constant 0 : i32
    %2 = arith.cmpi ne, %1, %c0_i32_0 : i32
    scf.if %2 {
      %cst_18 = arith.constant 0xFF800000 : f32
      %26 = vector.broadcast %cst_18 : f32 to vector<16x1xf32>
      %c0_19 = arith.constant 0 : index
      %c0_20 = arith.constant 0 : index
      %27 = vector.load %arg4[%c0_19, %c0_20] : memref<16x1xf32, #tpu.memory_space<vmem>>, vector<16x1xf32>
      tpu.vector_store %arg4[%c0_19, %c0_20], %26 {strides = array<i32>} : memref<16x1xf32, #tpu.memory_space<vmem>>, vector<16x1xf32>,
      %cst_21 = arith.constant 0.000000e+00 : f32
      %28 = vector.broadcast %cst_21 : f32 to vector<16x1xf32>
      %c0_22 = arith.constant 0 : index
      %c0_23 = arith.constant 0 : index
      %29 = vector.load %arg5[%c0_22, %c0_23] : memref<16x1xf32, #tpu.memory_space<vmem>>, vector<16x1xf32>
      tpu.vector_store %arg5[%c0_22, %c0_23], %28 {strides = array<i32>} : memref<16x1xf32, #tpu.memory_space<vmem>>, vector<16x1xf32>,
    } else {
    }
    %c0 = arith.constant 0 : index
    %c0_1 = arith.constant 0 : index
    %3 = vector.load %arg1[%c0, %c0_1] : memref<16x32xbf16, #tpu.memory_space<vmem>>, vector<16x32xbf16>
    %c0_2 = arith.constant 0 : index
    %c0_3 = arith.constant 0 : index
    %4 = vector.load %arg2[%c0_2, %c0_3] : memref<32x1024xbf16, #tpu.memory_space<vmem>>, vector<32x1024xbf16>
    %cst = arith.constant dense<0.000000e+00> : vector<16x1024xf32>
    %5 = tpu.matmul %3, %4, %cst {dimension_numbers = #tpu.dot_dimension_numbers<[1], [0], [0], [1], [0, 0, 1, 1], [], []>} : vector<16x32xbf16>, vector<32x1024xbf16>, vector<16x1024xf32> -> vector<16x1024xf32>
    %c0_4 = arith.constant 0 : index
    %c0_5 = arith.constant 0 : index
    %6 = vector.load %arg4[%c0_4, %c0_5] : memref<16x1xf32, #tpu.memory_space<vmem>>, vector<16x1xf32>
    %cst_6 = arith.constant dense<0xFF800000> : vector<16xf32>
    %7 = vector.multi_reduction <maximumf>, %5, %cst_6 [1] : vector<16x1024xf32> to vector<16xf32>
    %8 = vector.shape_cast %7 : vector<16xf32> to vector<16x1xf32>
    %9 = arith.maximumf %6, %8 : vector<16x1xf32>
    %c0_7 = arith.constant 0 : index
    %c0_8 = arith.constant 0 : index
    %10 = vector.load %arg5[%c0_7, %c0_8] : memref<16x1xf32, #tpu.memory_space<vmem>>, vector<16x1xf32>
    %c0_9 = arith.constant 0 : index
    %c0_10 = arith.constant 0 : index
    %11 = vector.load %arg4[%c0_9, %c0_10] : memref<16x1xf32, #tpu.memory_space<vmem>>, vector<16x1xf32>
    %12 = arith.subf %11, %9 : vector<16x1xf32>
    %13 = math.exp %12 : vector<16x1xf32>
    %14 = arith.mulf %10, %13 : vector<16x1xf32>
    %15 = vector.broadcast %9 : vector<16x1xf32> to vector<16x1024xf32>
    %16 = arith.subf %5, %15 : vector<16x1024xf32>
    %17 = math.exp %16 : vector<16x1024xf32>
    %cst_11 = arith.constant dense<0.000000e+00> : vector<16xf32>
    %18 = vector.multi_reduction <add>, %17, %cst_11 [1] : vector<16x1024xf32> to vector<16xf32>
    %19 = vector.shape_cast %18 : vector<16xf32> to vector<16x1xf32>
    %20 = arith.addf %14, %19 : vector<16x1xf32>
    %c0_12 = arith.constant 0 : index
    %c0_13 = arith.constant 0 : index
    %21 = vector.load %arg5[%c0_12, %c0_13] : memref<16x1xf32, #tpu.memory_space<vmem>>, vector<16x1xf32>
    tpu.vector_store %arg5[%c0_12, %c0_13], %20 {strides = array<i32>} : memref<16x1xf32, #tpu.memory_space<vmem>>, vector<16x1xf32>,
    %c0_14 = arith.constant 0 : index
    %c0_15 = arith.constant 0 : index
    %22 = vector.load %arg4[%c0_14, %c0_15] : memref<16x1xf32, #tpu.memory_space<vmem>>, vector<16x1xf32>
    tpu.vector_store %arg4[%c0_14, %c0_15], %9 {strides = array<i32>} : memref<16x1xf32, #tpu.memory_space<vmem>>, vector<16x1xf32>,
    %c0_i32_16 = arith.constant 0 : i32
    %23 = arith.cmpi eq, %arg0, %c0_i32_16 : i32
    %24 = arith.extui %23 : i1 to i32
    %c0_i32_17 = arith.constant 0 : i32
    %25 = arith.cmpi ne, %24, %c0_i32_17 : i32
    scf.if %25 {
      %c0_18 = arith.constant 0 : index
      %c0_19 = arith.constant 0 : index
      %26 = vector.load %arg4[%c0_18, %c0_19] : memref<16x1xf32, #tpu.memory_space<vmem>>, vector<16x1xf32>
      %c0_20 = arith.constant 0 : index
      %c0_21 = arith.constant 0 : index
      %27 = vector.load %arg5[%c0_20, %c0_21] : memref<16x1xf32, #tpu.memory_space<vmem>>, vector<16x1xf32>
      %28 = math.log %27 : vector<16x1xf32>
      %29 = arith.addf %26, %28 : vector<16x1xf32>
      %c0_22 = arith.constant 0 : index
      %c0_23 = arith.constant 0 : index
      %30 = vector.load %arg3[%c0_22, %c0_23] : memref<16x1xf32, #tpu.memory_space<vmem>>, vector<16x1xf32>
      tpu.vector_store %arg3[%c0_22, %c0_23], %29 {strides = array<i32>} : memref<16x1xf32, #tpu.memory_space<vmem>>, vector<16x1xf32>,
    } else {
    }
    return
  }
  func.func @transform_0(%arg0: i32) -> (i32, i32) {
    %c0_i32 = arith.constant 0 : i32
    %c0_i32_0 = arith.constant 0 : i32
    %c0_i32_1 = arith.constant 0 : i32
    return %c0_i32, %c0_i32_0 : i32, i32
  }
  func.func @transform_1(%arg0: i32) -> (i32, i32) {
    %c0_i32 = arith.constant 0 : i32
    %c0_i32_0 = arith.constant 0 : i32
    return %c0_i32, %arg0 : i32, i32
  }
  func.func @transform_2(%arg0: i32) -> (i32, i32) {
    %c0_i32 = arith.constant 0 : i32
    %c0_i32_0 = arith.constant 0 : i32
    %c0_i32_1 = arith.constant 0 : i32
    return %c0_i32, %c0_i32_0 : i32, i32
  }
}

</mosaic_0001>

<llo_original>
// kernel: tpu_custom_call.1
$region0: #{tpu_custom_call.1}
  #allocation0 [shape = 'u32[]', space=smem, size = 0x4, offset = 0x4, fixed_abs, tag = 'smem constant byte address 0x4 - core index']
  #allocation1 [shape = 'u32[144,128]{1,0:T(1,128)}', space=vmem, size = 0x12000, scoped, tag = 'internal scratch']
  #allocation2 [shape = 'f32[16,1]{1,0:T(8,128)}', space=vmem, size = 0x2000, scoped, tag = 'scratch operand']
  #allocation3 [shape = 'f32[16,1]{1,0:T(8,128)}', space=vmem, size = 0x2000, scoped, tag = 'scratch operand']
  %s0 = inlined_call_operand.hbm [shape: bf16[16,32], index: 0, kind: input, shape index: {}]
  %s1 = inlined_call_operand.hbm [shape: bf16[32,1024], index: 1, kind: input, shape index: {}]
  %s2 = inlined_call_operand.vmem [shape: f32[16,1], index: 2, kind: output, shape index: {}]
  %s3 = sld [smem:[#allocation0]]
  $region34: #{tpu_custom_call.1} parent=0
    _
  %s5 = ssub.s32 1, %s3
  %s6 = scalar_select 0, %s5, %s3
  $region1: #{tpu_custom_call.1} parent=0
    #allocation4 [shape = 'u8[4096]{0}', space=vmem, size = 0x1000, scoped, tag = 'input window, operand 0, single buffered']
    #allocation5 [shape = 's32[1]{0}', space=sflag, size = 0x4, scoped, tag = 'scoped memory for tpu_custom_call.1']
    #allocation6 [shape = 'u8[65536]{0}', space=vmem, size = 0x10000, scoped, tag = 'input window, operand 1, single buffered']
    #allocation7 [shape = 's32[1]{0}', space=sflag, size = 0x4, scoped, tag = 'scoped memory for tpu_custom_call.1']
    %7 = vsyncpa [#allocation5], 0
    %8 = vsyncpa [#allocation7], 0
    // Predicated region
    $region2: #{tpu_custom_call.1} parent=1 // pred_check
      _
    $region3: #{tpu_custom_call.1} parent=1 // pred_check_branch
      %10 = sbr.rel (0) target = $region5
    $region4: #{tpu_custom_call.1} parent=1 // pred_region
      %s12 = ssub.s32 128, 128
      %13 = vsyncadd [#allocation5], %s12
      %s14 = sshll.u32 [#allocation4], 4
      %s15 = int_to_ptr.vmem [resolvable:$true] %s14
      %20 = dma.hbm_to_vmem [thread:$0]  %s0, 128, %s15, [#allocation5], 64, 64, 4
    $region5: #{tpu_custom_call.1} parent=1 // pred_fallthru
      _
    // Predicated region
    $region6: #{tpu_custom_call.1} parent=1 // pred_check
      _
    $region7: #{tpu_custom_call.1} parent=1 // pred_check_branch
      %22 = sbr.rel (0) target = $region9
    $region8: #{tpu_custom_call.1} parent=1 // pred_region
      %s24 = ssub.s32 2048, 2048
      %25 = vsyncadd [#allocation7], %s24
      %s26 = sshll.u32 [#allocation6], 4
      %s27 = int_to_ptr.vmem [resolvable:$true] %s26
      %32 = dma.hbm_to_vmem [thread:$0]  %s1, 2048, %s27, [#allocation7], 512, 512, 32
    $region9: #{tpu_custom_call.1} parent=1 // pred_fallthru
      _
    // Predicated region
    $region10: #{tpu_custom_call.1} parent=1 // pred_check
      _
    $region11: #{tpu_custom_call.1} parent=1 // pred_check_branch
      %34 = sbr.rel (0) target = $region13
    $region12: #{tpu_custom_call.1} parent=1 // pred_region
      %35 = dma.done [#allocation5], 128
    $region13: #{tpu_custom_call.1} parent=1 // pred_fallthru
      _
    // Predicated region
    $region14: #{tpu_custom_call.1} parent=1 // pred_check
      _
    $region15: #{tpu_custom_call.1} parent=1 // pred_check_branch
      %37 = sbr.rel (0) target = $region17
    $region16: #{tpu_custom_call.1} parent=1 // pred_region
      %38 = dma.done [#allocation7], 2048
    $region17: #{tpu_custom_call.1} parent=1 // pred_fallthru
      _
    %p40 = scmp.eq.s32.totalorder 0, 0
    // Predicated region
    $region18: #{tpu_custom_call.1} parent=1 // pred_check
      %p41 = pneg %p40
    $region19: #{tpu_custom_call.1} parent=1 // pred_check_branch
      %43 = sbr.rel (%p41) target = $region21
    $region20: #{tpu_custom_call.1} parent=1 // pred_region
      %vm44 = vcmask 7168
      %45 = vst.msk [vmem:[#allocation2] sm:$0xff] %vm44, -inf
      %46 = vst.msk [vmem:[#allocation2 + $0x8] sm:$0xff] %vm44, -inf
      %47 = vst.msk [vmem:[#allocation3] sm:$0xff] %vm44, 0.0
      %48 = vst.msk [vmem:[#allocation3 + $0x8] sm:$0xff] %vm44, 0.0
    $region21: #{tpu_custom_call.1} parent=1 // pred_fallthru
      _
    %v49 = vld [vmem:[#allocation4] sm:$0xf]
    %v50 = vld [vmem:[#allocation4 + $0x4] sm:$0xf]
    %v51 = vld [vmem:[#allocation6] sm:$0xff]
    %v52 = vld [vmem:[#allocation6 + $0x8] sm:$0xff]
    %v53 = vld [vmem:[#allocation6 + $0x10] sm:$0xff]
    %v54 = vld [vmem:[#allocation6 + $0x18] sm:$0xff]
    %v55 = vld [vmem:[#allocation6 + $0x20] sm:$0xff]
    %v56 = vld [vmem:[#allocation6 + $0x28] sm:$0xff]
    %v57 = vld [vmem:[#allocation6 + $0x30] sm:$0xff]
    %v58 = vld [vmem:[#allocation6 + $0x38] sm:$0xff]
    %v59 = vld [vmem:[#allocation6 + $0x40] sm:$0xff]
    %v60 = vld [vmem:[#allocation6 + $0x48] sm:$0xff]
    %v61 = vld [vmem:[#allocation6 + $0x50] sm:$0xff]
    %v62 = vld [vmem:[#allocation6 + $0x58] sm:$0xff]
    %v63 = vld [vmem:[#allocation6 + $0x60] sm:$0xff]
    %v64 = vld [vmem:[#allocation6 + $0x68] sm:$0xff]
    %v65 = vld [vmem:[#allocation6 + $0x70] sm:$0xff]
    %v66 = vld [vmem:[#allocation6 + $0x78] sm:$0xff]
    %v69 = vunpack.c.l.b16 %v49
    %v70 = vunpack.c.l.b16 %v50
    %v71 = vpack.c.b16 %v70, %v69
    %v88 = vunpack.c.l.b16 %v51
    %v89 = vunpack.c.h.b16 %v51
    %v90 = vunpack.c.l.b16 %v52
    %v91 = vunpack.c.h.b16 %v52
    %v92 = vunpack.c.l.b16 %v53
    %v93 = vunpack.c.h.b16 %v53
    %v94 = vunpack.c.l.b16 %v54
    %v95 = vunpack.c.h.b16 %v54
    %v96 = vunpack.c.l.b16 %v55
    %v97 = vunpack.c.h.b16 %v55
    %v98 = vunpack.c.l.b16 %v56
    %v99 = vunpack.c.h.b16 %v56
    %v100 = vunpack.c.l.b16 %v57
    %v101 = vunpack.c.h.b16 %v57
    %v102 = vunpack.c.l.b16 %v58
    %v103 = vunpack.c.h.b16 %v58
    %v104 = vunpack.c.l.b16 %v59
    %v105 = vunpack.c.h.b16 %v59
    %v106 = vunpack.c.l.b16 %v60
    %v107 = vunpack.c.h.b16 %v60
    %v108 = vunpack.c.l.b16 %v61
    %v109 = vunpack.c.h.b16 %v61
    %v110 = vunpack.c.l.b16 %v62
    %v111 = vunpack.c.h.b16 %v62
    %v112 = vunpack.c.l.b16 %v63
    %v113 = vunpack.c.h.b16 %v63
    %v114 = vunpack.c.l.b16 %v64
    %v115 = vunpack.c.h.b16 %v64
    %v116 = vunpack.c.l.b16 %v65
    %v117 = vunpack.c.h.b16 %v65
    %v118 = vunpack.c.l.b16 %v66
    %v119 = vunpack.c.h.b16 %v66
    %v120 = vpack.c.b16 %v96, %v88
    %v121 = vpack.c.b16 %v97, %v89
    %v122 = vpack.c.b16 %v98, %v90
    %v123 = vpack.c.b16 %v99, %v91
    %v124 = vpack.c.b16 %v100, %v92
    %v125 = vpack.c.b16 %v101, %v93
    %v126 = vpack.c.b16 %v102, %v94
    %v127 = vpack.c.b16 %v103, %v95
    %v128 = vpack.c.b16 %v112, %v104
    %v129 = vpack.c.b16 %v113, %v105
    %v130 = vpack.c.b16 %v114, %v106
    %v131 = vpack.c.b16 %v115, %v107
    %v132 = vpack.c.b16 %v116, %v108
    %v133 = vpack.c.b16 %v117, %v109
    %v134 = vpack.c.b16 %v118, %v110
    %v135 = vpack.c.b16 %v119, %v111
    %vm152 = vcmask 261120
    %v154 = vsel %vm152, %v71, 0
    %156 = vmatprep.subr.bf16.mxu0 %v121
    %157 = vmatpush1.bf16.msra.mxu0 %v120
    %158 = vmatprep.subr.bf16.mxu0 %v129
    %159 = vmatpush1.bf16.msra.mxu0 %v128
    %160 = vmatprep.subr.bf16.mxu0 0
    %161 = vmatpush1.bf16.msra.mxu0 0
    %162 = vmatprep.subr.bf16.mxu0 0
    %163 = vmatpush1.bf16.msra.mxu0 0
    %164 = vmatprep.subr.bf16.mxu0 0
    %165 = vmatpush1.bf16.msra.mxu0 0
    %166 = vmatprep.subr.bf16.mxu0 0
    %167 = vmatpush1.bf16.msra.mxu0 0
    %168 = vmatprep.subr.bf16.mxu0 0
    %169 = vmatpush1.bf16.msra.mxu0 0
    %170 = vmatprep.subr.bf16.mxu0 0
    %171 = vmatpush1.bf16.msra.mxu0 0
    %172 = vmatprep.subr.bf16.mxu0 0
    %173 = vmatpush1.bf16.msra.mxu0 0
    %174 = vmatprep.subr.bf16.mxu0 0
    %175 = vmatpush1.bf16.msra.mxu0 0
    %176 = vmatprep.subr.bf16.mxu0 0
    %177 = vmatpush1.bf16.msra.mxu0 0
    %178 = vmatprep.subr.bf16.mxu0 0
    %179 = vmatpush1.bf16.msra.mxu0 0
    %180 = vmatprep.subr.bf16.mxu0 0
    %181 = vmatpush1.bf16.msra.mxu0 0
    %182 = vmatprep.subr.bf16.mxu0 0
    %183 = vmatpush1.bf16.msra.mxu0 0
    %184 = vmatprep.subr.bf16.mxu0 0
    %185 = vmatpush1.bf16.msra.mxu0 0
    %186 = vmatprep.subr.bf16.mxu0 0
    %187 = vmatpush1.bf16.msra.mxu0 0
    %188 = vmatprep.mubr.bf16.mxu0 0
    %189 = vmatmul.mubr.bf16.gmra.mrb[0].mxu0 %v154
    %v190 = vpop.f32.mrb[0].mxu0
    %v191 = vadd.f32 0.0, %v190
    %v192 = vpop.f32.mrb[0].mxu0
    %v193 = vadd.f32 0.0, %v192
    %v194 = vpop.f32.mrb[0].mxu0
    %v195 = vadd.f32 0.0, %v194
    %v196 = vpop.f32.mrb[0].mxu0
    %v197 = vadd.f32 0.0, %v196
    %198 = vdwg.mxu0
    %199 = vmatprep.subr.bf16.mxu0 %v123
    %200 = vmatpush1.bf16.msra.mxu0 %v122
    %201 = vmatprep.subr.bf16.mxu0 %v131
    %202 = vmatpush1.bf16.msra.mxu0 %v130
    %203 = vmatprep.subr.bf16.mxu0 0
    %204 = vmatpush1.bf16.msra.mxu0 0
    %205 = vmatprep.subr.bf16.mxu0 0
    %206 = vmatpush1.bf16.msra.mxu0 0
    %207 = vmatprep.subr.bf16.mxu0 0
    %208 = vmatpush1.bf16.msra.mxu0 0
    %209 = vmatprep.subr.bf16.mxu0 0
    %210 = vmatpush1.bf16.msra.mxu0 0
    %211 = vmatprep.subr.bf16.mxu0 0
    %212 = vmatpush1.bf16.msra.mxu0 0
    %213 = vmatprep.subr.bf16.mxu0 0
    %214 = vmatpush1.bf16.msra.mxu0 0
    %215 = vmatprep.subr.bf16.mxu0 0
    %216 = vmatpush1.bf16.msra.mxu0 0
    %217 = vmatprep.subr.bf16.mxu0 0
    %218 = vmatpush1.bf16.msra.mxu0 0
    %219 = vmatprep.subr.bf16.mxu0 0
    %220 = vmatpush1.bf16.msra.mxu0 0
    %221 = vmatprep.subr.bf16.mxu0 0
    %222 = vmatpush1.bf16.msra.mxu0 0
    %223 = vmatprep.subr.bf16.mxu0 0
    %224 = vmatpush1.bf16.msra.mxu0 0
    %225 = vmatprep.subr.bf16.mxu0 0
    %226 = vmatpush1.bf16.msra.mxu0 0
    %227 = vmatprep.subr.bf16.mxu0 0
    %228 = vmatpush1.bf16.msra.mxu0 0
    %229 = vmatprep.subr.bf16.mxu0 0
    %230 = vmatpush1.bf16.msra.mxu0 0
    %231 = vmatprep.mubr.bf16.mxu0 0
    %232 = vmatmul.mubr.bf16.gmra.mrb[0].mxu0 %v154
    %v233 = vpop.f32.mrb[0].mxu0
    %v234 = vadd.f32 0.0, %v233
    %v235 = vpop.f32.mrb[0].mxu0
    %v236 = vadd.f32 0.0, %v235
    %v237 = vpop.f32.mrb[0].mxu0
    %v238 = vadd.f32 0.0, %v237
    %v239 = vpop.f32.mrb[0].mxu0
    %v240 = vadd.f32 0.0, %v239
    %241 = vdwg.mxu0
    %242 = vmatprep.subr.bf16.mxu0 %v125
    %243 = vmatpush1.bf16.msra.mxu0 %v124
    %244 = vmatprep.subr.bf16.mxu0 %v133
    %245 = vmatpush1.bf16.msra.mxu0 %v132
    %246 = vmatprep.subr.bf16.mxu0 0
    %247 = vmatpush1.bf16.msra.mxu0 0
    %248 = vmatprep.subr.bf16.mxu0 0
    %249 = vmatpush1.bf16.msra.mxu0 0
    %250 = vmatprep.subr.bf16.mxu0 0
    %251 = vmatpush1.bf16.msra.mxu0 0
    %252 = vmatprep.subr.bf16.mxu0 0
    %253 = vmatpush1.bf16.msra.mxu0 0
    %254 = vmatprep.subr.bf16.mxu0 0
    %255 = vmatpush1.bf16.msra.mxu0 0
    %256 = vmatprep.subr.bf16.mxu0 0
    %257 = vmatpush1.bf16.msra.mxu0 0
    %258 = vmatprep.subr.bf16.mxu0 0
    %259 = vmatpush1.bf16.msra.mxu0 0
    %260 = vmatprep.subr.bf16.mxu0 0
    %261 = vmatpush1.bf16.msra.mxu0 0
    %262 = vmatprep.subr.bf16.mxu0 0
    %263 = vmatpush1.bf16.msra.mxu0 0
    %264 = vmatprep.subr.bf16.mxu0 0
    %265 = vmatpush1.bf16.msra.mxu0 0
    %266 = vmatprep.subr.bf16.mxu0 0
    %267 = vmatpush1.bf16.msra.mxu0 0
    %268 = vmatprep.subr.bf16.mxu0 0
    %269 = vmatpush1.bf16.msra.mxu0 0
    %270 = vmatprep.subr.bf16.mxu0 0
    %271 = vmatpush1.bf16.msra.mxu0 0
    %272 = vmatprep.subr.bf16.mxu0 0
    %273 = vmatpush1.bf16.msra.mxu0 0
    %274 = vmatprep.mubr.bf16.mxu0 0
    %275 = vmatmul.mubr.bf16.gmra.mrb[0].mxu0 %v154
    %v276 = vpop.f32.mrb[0].mxu0
    %v277 = vadd.f32 0.0, %v276
    %v278 = vpop.f32.mrb[0].mxu0
    %v279 = vadd.f32 0.0, %v278
    %v280 = vpop.f32.mrb[0].mxu0
    %v281 = vadd.f32 0.0, %v280
    %v282 = vpop.f32.mrb[0].mxu0
    %v283 = vadd.f32 0.0, %v282
    %284 = vdwg.mxu0
    %285 = vmatprep.subr.bf16.mxu0 %v127
    %286 = vmatpush1.bf16.msra.mxu0 %v126
    %287 = vmatprep.subr.bf16.mxu0 %v135
    %288 = vmatpush1.bf16.msra.mxu0 %v134
    %289 = vmatprep.subr.bf16.mxu0 0
    %290 = vmatpush1.bf16.msra.mxu0 0
    %291 = vmatprep.subr.bf16.mxu0 0
    %292 = vmatpush1.bf16.msra.mxu0 0
    %293 = vmatprep.subr.bf16.mxu0 0
    %294 = vmatpush1.bf16.msra.mxu0 0
    %295 = vmatprep.subr.bf16.mxu0 0
    %296 = vmatpush1.bf16.msra.mxu0 0
    %297 = vmatprep.subr.bf16.mxu0 0
    %298 = vmatpush1.bf16.msra.mxu0 0
    %299 = vmatprep.subr.bf16.mxu0 0
    %300 = vmatpush1.bf16.msra.mxu0 0
    %301 = vmatprep.subr.bf16.mxu0 0
    %302 = vmatpush1.bf16.msra.mxu0 0
    %303 = vmatprep.subr.bf16.mxu0 0
    %304 = vmatpush1.bf16.msra.mxu0 0
    %305 = vmatprep.subr.bf16.mxu0 0
    %306 = vmatpush1.bf16.msra.mxu0 0
    %307 = vmatprep.subr.bf16.mxu0 0
    %308 = vmatpush1.bf16.msra.mxu0 0
    %309 = vmatprep.subr.bf16.mxu0 0
    %310 = vmatpush1.bf16.msra.mxu0 0
    %311 = vmatprep.subr.bf16.mxu0 0
    %312 = vmatpush1.bf16.msra.mxu0 0
    %313 = vmatprep.subr.bf16.mxu0 0
    %314 = vmatpush1.bf16.msra.mxu0 0
    %315 = vmatprep.subr.bf16.mxu0 0
    %316 = vmatpush1.bf16.msra.mxu0 0
    %317 = vmatprep.mubr.bf16.mxu0 0
    %318 = vmatmul.mubr.bf16.gmra.mrb[0].mxu0 %v154
    %v319 = vpop.f32.mrb[0].mxu0
    %v320 = vadd.f32 0.0, %v319
    %v321 = vpop.f32.mrb[0].mxu0
    %v322 = vadd.f32 0.0, %v321
    %v323 = vpop.f32.mrb[0].mxu0
    %v324 = vadd.f32 0.0, %v323
    %v325 = vpop.f32.mrb[0].mxu0
    %v326 = vadd.f32 0.0, %v325
    %327 = vdwg.mxu0
    %v328 = vld [vmem:[#allocation2] sm:$0xff]
    %v329 = vld [vmem:[#allocation2 + $0x8] sm:$0xff]
    %v330 = vmax.f32 %v191, %v234
    %v331 = vmax.f32 %v193, %v236
    %v332 = vmax.f32 %v330, %v277
    %v333 = vmax.f32 %v331, %v279
    %v334 = vmax.f32 %v332, %v320
    %v335 = vmax.f32 %v333, %v322
    %v336 = vmax.f32 %v334, %v335
    %337 = vmax.xlane.f32.xlu0 %v336
    %v338 = vpop.xlane.xlu0 %337
    %v339 = vmax.f32 %v195, %v238
    %v340 = vmax.f32 %v197, %v240
    %v341 = vmax.f32 %v339, %v281
    %v342 = vmax.f32 %v340, %v283
    %v343 = vmax.f32 %v341, %v324
    %v344 = vmax.f32 %v342, %v326
    %v345 = vmax.f32 %v343, %v344
    %346 = vmax.xlane.f32.xlu0 %v345
    %v347 = vpop.xlane.xlu0 %346
    %v348 = vmax.f32 %v328, %v338
    %v349 = vmax.f32 %v329, %v347
    %v350 = vld [vmem:[#allocation3] sm:$0xff]
    %v351 = vld [vmem:[#allocation3 + $0x8] sm:$0xff]
    %v352 = vsub.f32 %v328, %v348
    %v353 = vsub.f32 %v329, %v349
    %v354 = vmul.f32 %v352, 1.442695
    %v355 = vpow.pop %v354
    %v356 = vmul.f32 %v353, 1.442695
    %v357 = vpow.pop %v356
    %v358 = vmul.f32 %v350, %v355
    %v359 = vmul.f32 %v351, %v357
    %361 = vset.pattern.permute.xlu0 0
    %362 = vperm.xlu0 %361, %v348
    %v363 = vpop.permute.xlu0 %362
    %366 = vset.pattern.permute.xlu0 0
    %367 = vperm.xlu0 %366, %v349
    %v368 = vpop.permute.xlu0 %367
    %v370 = vsub.f32 %v191, %v363
    %v371 = vsub.f32 %v193, %v363
    %v372 = vsub.f32 %v234, %v363
    %v373 = vsub.f32 %v236, %v363
    %v374 = vsub.f32 %v277, %v363
    %v375 = vsub.f32 %v279, %v363
    %v376 = vsub.f32 %v320, %v363
    %v377 = vsub.f32 %v322, %v363
    %v378 = vsub.f32 %v195, %v368
    %v379 = vsub.f32 %v197, %v368
    %v380 = vsub.f32 %v238, %v368
    %v381 = vsub.f32 %v240, %v368
    %v382 = vsub.f32 %v281, %v368
    %v383 = vsub.f32 %v283, %v368
    %v384 = vsub.f32 %v324, %v368
    %v385 = vsub.f32 %v326, %v368
    %v386 = vmul.f32 %v370, 1.442695
    %v387 = vpow.pop %v386
    %v388 = vmul.f32 %v371, 1.442695
    %v389 = vpow.pop %v388
    %v390 = vmul.f32 %v372, 1.442695
    %v391 = vpow.pop %v390
    %v392 = vmul.f32 %v373, 1.442695
    %v393 = vpow.pop %v392
    %v394 = vmul.f32 %v374, 1.442695
    %v395 = vpow.pop %v394
    %v396 = vmul.f32 %v375, 1.442695
    %v397 = vpow.pop %v396
    %v398 = vmul.f32 %v376, 1.442695
    %v399 = vpow.pop %v398
    %v400 = vmul.f32 %v377, 1.442695
    %v401 = vpow.pop %v400
    %v402 = vmul.f32 %v378, 1.442695
    %v403 = vpow.pop %v402
    %v404 = vmul.f32 %v379, 1.442695
    %v405 = vpow.pop %v404
    %v406 = vmul.f32 %v380, 1.442695
    %v407 = vpow.pop %v406
    %v408 = vmul.f32 %v381, 1.442695
    %v409 = vpow.pop %v408
    %v410 = vmul.f32 %v382, 1.442695
    %v411 = vpow.pop %v410
    %v412 = vmul.f32 %v383, 1.442695
    %v413 = vpow.pop %v412
    %v414 = vmul.f32 %v384, 1.442695
    %v415 = vpow.pop %v414
    %v416 = vmul.f32 %v385, 1.442695
    %v417 = vpow.pop %v416
    %v418 = vadd.f32 %v387, %v389
    %v419 = vadd.f32 %v418, %v391
    %v420 = vadd.f32 %v419, %v393
    %v421 = vadd.f32 %v420, %v395
    %v422 = vadd.f32 %v421, %v397
    %v423 = vadd.f32 %v422, %v399
    %v424 = vadd.f32 %v423, %v401
    %425 = vadd.xlane.f32.xlu0 %v424
    %v426 = vpop.xlane.xlu0 %425
    %v427 = vadd.f32 %v403, %v405
    %v428 = vadd.f32 %v427, %v407
    %v429 = vadd.f32 %v428, %v409
    %v430 = vadd.f32 %v429, %v411
    %v431 = vadd.f32 %v430, %v413
    %v432 = vadd.f32 %v431, %v415
    %v433 = vadd.f32 %v432, %v417
    %434 = vadd.xlane.f32.xlu0 %v433
    %v435 = vpop.xlane.xlu0 %434
    %v436 = vadd.f32 %v358, %v426
    %v437 = vadd.f32 %v359, %v435
    %vm438 = vcmask 7168
    %439 = vst.msk [vmem:[#allocation3] sm:$0xff] %vm438, %v436
    %440 = vst.msk [vmem:[#allocation3 + $0x8] sm:$0xff] %vm438, %v437
    %441 = vst.msk [vmem:[#allocation2] sm:$0xff] %vm438, %v348
    %442 = vst.msk [vmem:[#allocation2 + $0x8] sm:$0xff] %vm438, %v349
    // Predicated region
    $region22: #{tpu_custom_call.1} parent=1 // pred_check
      %p443 = pneg %p40
    $region23: #{tpu_custom_call.1} parent=1 // pred_check_branch
      %445 = sbr.rel (%p443) target = $region25
    $region24: #{tpu_custom_call.1} parent=1 // pred_region
      %v446 = vld [vmem:[#allocation2] sm:$0xff]
      %v447 = vld [vmem:[#allocation2 + $0x8] sm:$0xff]
      %v448 = vld [vmem:[#allocation3] sm:$0xff]
      %v449 = vld [vmem:[#allocation3 + $0x8] sm:$0xff]
      %v450 = vlog2.pop %v448
      %v451 = vmul.f32 %v450, 0.6931472
      %v452 = vlog2.pop %v449
      %v453 = vmul.f32 %v452, 0.6931472
      %v454 = vadd.f32 %v446, %v451
      %v455 = vadd.f32 %v447, %v453
      %456 = vst.msk [vmem:[%s2] sm:$0xff] %vm438, %v454
      %457 = vst.msk [vmem:[%s2 + $0x8] sm:$0xff] %vm438, %v455
    $region25: #{tpu_custom_call.1} parent=1 // pred_fallthru
      _
    // Predicated region
    $region26: #{tpu_custom_call.1} parent=1 // pred_check
      _
    $region27: #{tpu_custom_call.1} parent=1 // pred_check_branch
      %459 = sbr.rel (0) target = $region29
    $region28: #{tpu_custom_call.1} parent=1 // pred_region
      _
    $region29: #{tpu_custom_call.1} parent=1 // pred_fallthru
      _
    // Predicated region
    $region30: #{tpu_custom_call.1} parent=1 // pred_check
      _
    $region31: #{tpu_custom_call.1} parent=1 // pred_check_branch
      %461 = sbr.rel (0) target = $region33
    $region32: #{tpu_custom_call.1} parent=1 // pred_region
      _
    $region33: #{tpu_custom_call.1} parent=1 // pred_fallthru
      _
    %462 = vsyncpa [#allocation5], 1
    %463 = vsyncpa [#allocation7], 1

</llo_original>
